<compile_context>
chip_gen: v7x
topology: tpu7x:2x2x1
jax: 0.10.0
libtpu: 0.0.40
codegen_flags: <defaults>
</compile_context>

<pallas_src>
import jax
import jax.numpy as jnp
from jax.experimental import pallas as pl
from jax.experimental.pallas import tpu as pltpu


def _eca_kernel(x_ref, band_ref, o_ref):
    # x_ref block: (1, C, HW); band_ref: (C, C) f32; o_ref block: (1, C, HW)
    x = x_ref[0].astype(jnp.float32)                              # (C, HW)
    hw = x.shape[-1]
    # Channel conv as a banded matmul (lane-dense: output minor dim = HW).
    y_full = jnp.dot(band_ref[...], x, preferred_element_type=jnp.float32)
    # Global average pool (== conv applied to the pooled means, by linearity).
    y = jnp.sum(y_full, axis=-1, keepdims=True) * (1.0 / hw)      # (C, 1)
    attn = 1.0 / (1.0 + jnp.exp(-y))                              # sigmoid (EUP)
    o_ref[0] = (x * attn).astype(o_ref.dtype)


def _band_matrix(w, C):
    """(C, C) banded matrix equivalent to Conv1d(1, 1, k, pad=(k-1)//2, bias=False)."""
    k = int(w.shape[0])
    pad = (k - 1) // 2
    i = jnp.arange(C)[:, None]
    j = jnp.arange(C)[None, :]
    band = jnp.zeros((C, C), jnp.float32)
    for t in range(k):  # band[i, j] = w[j - i + pad] for |j - i| <= pad, else 0
        band = band + jnp.where(j - i == t - pad, w[t].astype(jnp.float32), 0.0)
    return band


def eca_forward(x_nchw, conv_w):
    """ECA layer forward: x (B, C, H, W), conv_w (k,) -> (B, C, H, W)."""
    B, C, H, W = x_nchw.shape
    HW = H * W
    x = x_nchw.reshape(B, C, HW)          # free row-major reshape (NCHW-native)
    band = _band_matrix(conv_w, C)        # (C, C) f32

    out = pl.pallas_call(
        _eca_kernel,
        out_shape=jax.ShapeDtypeStruct((B, C, HW), x_nchw.dtype),
        grid_spec=pltpu.PrefetchScalarGridSpec(
            num_scalar_prefetch=0,
            grid=(B,),
            in_specs=[
                pl.BlockSpec((1, C, HW), lambda b: (b, 0, 0)),
                pl.BlockSpec((C, C), lambda b: (0, 0)),
            ],
            out_specs=pl.BlockSpec((1, C, HW), lambda b: (b, 0, 0)),
        ),
        compiler_params=pltpu.CompilerParams(
            dimension_semantics=("parallel",),
        ),
    )(x, band)
    return out.reshape(B, C, H, W)


def _eca_ref(x, w):
    """Pure-JAX reference mirroring the PyTorch eca_layer forward (NCHW)."""
    B, C, H, W = x.shape
    k = int(w.shape[0])
    pad = (k - 1) // 2
    m = jnp.mean(x, axis=(2, 3))                      # adaptive avg pool -> (B, C)
    mp = jnp.pad(m, ((0, 0), (pad, pad)))             # zero-padded channel axis
    y = jnp.zeros_like(m)
    for t in range(k):                                # Conv1d = cross-correlation
        y = y + w[t] * mp[:, t:t + C]
    a = jax.nn.sigmoid(y)
    return x * a[:, :, None, None]


if __name__ == "__main__":
    key = jax.random.PRNGKey(0)
    kx, kw = jax.random.split(key)
    x = jax.random.normal(kx, (2, 4, 16, 16), dtype=jnp.float32)   # (B, C, H, W)
    w = jax.random.normal(kw, (3,), dtype=jnp.float32) * 0.5       # Conv1d(1,1,3) weight

    out = eca_forward(x, w)
    out = jax.block_until_ready(out)

    ref = _eca_ref(x, w)
    assert out.shape == x.shape, out.shape
    err = float(jnp.max(jnp.abs(out - ref)))
    assert jnp.allclose(out, ref, atol=1e-5, rtol=1e-5), f"mismatch vs reference: {err}"

    print("KERNEL_OK")
</pallas_src>

<mosaic_0001>
module attributes {stable_mosaic.version = 11 : i64} {
  func.func @_eca_kernel(%arg0: i32, %arg1: memref<1x4x256xf32, #tpu.memory_space<vmem>>, %arg2: memref<4x4xf32, #tpu.memory_space<vmem>>, %arg3: memref<1x4x256xf32, #tpu.memory_space<vmem>>) attributes {dimension_semantics = [#tpu.dimension_semantics<parallel>], iteration_bounds = array<i64: 2>, scalar_prefetch = 0 : i64, scratch_operands = 0 : i64, tpu.core_type = #tpu.core_type<tc>, window_params = [{transform_indices = @transform_0, window_bounds = array<i64: 1, 4, 256>}, {pipeline_mode = #tpu.pipeline_mode<synchronous>, transform_indices = @transform_1, window_bounds = array<i64: 4, 4>}, {transform_indices = @transform_2, window_bounds = array<i64: 1, 4, 256>}]} {
    %c0 = arith.constant 0 : index
    %c0_0 = arith.constant 0 : index
    %c0_1 = arith.constant 0 : index
    %0 = vector.load %arg1[%c0, %c0_0, %c0_1] : memref<1x4x256xf32, #tpu.memory_space<vmem>>, vector<1x4x256xf32>
    %1 = vector.shape_cast %0 : vector<1x4x256xf32> to vector<4x256xf32>
    %c0_2 = arith.constant 0 : index
    %c0_3 = arith.constant 0 : index
    %2 = vector.load %arg2[%c0_2, %c0_3] : memref<4x4xf32, #tpu.memory_space<vmem>>, vector<4x4xf32>
    %cst = arith.constant dense<0.000000e+00> : vector<4x256xf32>
    %3 = tpu.matmul %2, %1, %cst {dimension_numbers = #tpu.dot_dimension_numbers<[1], [0], [0], [1], [0, 0, 1, 1], [], []>} : vector<4x4xf32>, vector<4x256xf32>, vector<4x256xf32> -> vector<4x256xf32>
    %cst_4 = arith.constant dense<0.000000e+00> : vector<4xf32>
    %4 = vector.multi_reduction <add>, %3, %cst_4 [1] : vector<4x256xf32> to vector<4xf32>
    %5 = vector.shape_cast %4 : vector<4xf32> to vector<4x1xf32>
    %cst_5 = arith.constant 3.906250e-03 : f32
    %6 = vector.broadcast %cst_5 : f32 to vector<4x1xf32>
    %7 = arith.mulf %5, %6 : vector<4x1xf32>
    %cst_6 = arith.constant 0.000000e+00 : f32
    %8 = vector.broadcast %cst_6 : f32 to vector<4x1xf32>
    %9 = arith.subf %8, %7 : vector<4x1xf32>
    %10 = math.exp %9 : vector<4x1xf32>
    %cst_7 = arith.constant 1.000000e+00 : f32
    %11 = vector.broadcast %cst_7 : f32 to vector<4x1xf32>
    %12 = arith.addf %11, %10 : vector<4x1xf32>
    %cst_8 = arith.constant 1.000000e+00 : f32
    %13 = vector.broadcast %cst_8 : f32 to vector<4x1xf32>
    %14 = arith.divf %13, %12 : vector<4x1xf32>
    %15 = vector.broadcast %14 : vector<4x1xf32> to vector<4x256xf32>
    %16 = arith.mulf %1, %15 : vector<4x256xf32>
    %c0_9 = arith.constant 0 : index
    %c0_10 = arith.constant 0 : index
    %c0_11 = arith.constant 0 : index
    %17 = vector.load %arg3[%c0_9, %c0_10, %c0_11] : memref<1x4x256xf32, #tpu.memory_space<vmem>>, vector<1x4x256xf32>
    %18 = vector.shape_cast %17 : vector<1x4x256xf32> to vector<4x256xf32>
    %19 = vector.shape_cast %16 : vector<4x256xf32> to vector<1x4x256xf32>
    tpu.vector_store %arg3[%c0_9, %c0_10, %c0_11], %19 {strides = array<i32>} : memref<1x4x256xf32, #tpu.memory_space<vmem>>, vector<1x4x256xf32>,
    return
  }
  func.func @transform_0(%arg0: i32) -> (i32, i32, i32) {
    %c0_i32 = arith.constant 0 : i32
    %c0_i32_0 = arith.constant 0 : i32
    %c0_i32_1 = arith.constant 0 : i32
    return %arg0, %c0_i32, %c0_i32_0 : i32, i32, i32
  }
  func.func @transform_1(%arg0: i32) -> (i32, i32) {
    %c0_i32 = arith.constant 0 : i32
    %c0_i32_0 = arith.constant 0 : i32
    %c0_i32_1 = arith.constant 0 : i32
    return %c0_i32, %c0_i32_0 : i32, i32
  }
  func.func @transform_2(%arg0: i32) -> (i32, i32, i32) {
    %c0_i32 = arith.constant 0 : i32
    %c0_i32_0 = arith.constant 0 : i32
    %c0_i32_1 = arith.constant 0 : i32
    return %arg0, %c0_i32, %c0_i32_0 : i32, i32, i32
  }
}

</mosaic_0001>

<llo_original>
// kernel: tpu_custom_call.1
$region0: #{tpu_custom_call.1}
  #allocation0 [shape = 'u32[]', space=smem, size = 0x4, offset = 0x4, fixed_abs, tag = 'smem constant byte address 0x4 - core index']
  #allocation1 [shape = 'u32[144,128]{1,0:T(1,128)}', space=vmem, size = 0x12000, scoped, tag = 'internal scratch']
  %s0 = inlined_call_operand.hbm [shape: f32[2,4,256], index: 0, kind: input, shape index: {}]
  %s1 = inlined_call_operand.hbm [shape: f32[4,4], index: 1, kind: input, shape index: {}]
  %s2 = inlined_call_operand.hbm [shape: f32[2,4,256], index: 2, kind: output, shape index: {}]
  %s3 = sld [smem:[#allocation0]]
  $region49: #{tpu_custom_call.1} parent=0
    _
  %s5 = ssub.s32 1, %s3
  %s6 = scalar_select 0, %s5, %s3
  $region1: #{tpu_custom_call.1} parent=0
    #allocation2 [shape = 'u8[8192]{0}', space=vmem, size = 0x2000, scoped, tag = 'input window, operand 0']
    #allocation3 [shape = 's32[2]{0}', space=sflag, size = 0x8, scoped, tag = 'scoped memory for tpu_custom_call.1']
    #allocation4 [shape = 's32[2]{0}', space=sflag, size = 0x8, scoped, tag = 'scoped memory for tpu_custom_call.1']
    #allocation5 [shape = 'u8[2048]{0}', space=vmem, size = 0x800, scoped, tag = 'input window, operand 1, single buffered']
    #allocation6 [shape = 's32[1]{0}', space=sflag, size = 0x4, scoped, tag = 'scoped memory for tpu_custom_call.1']
    #allocation7 [shape = 'u8[8192]{0}', space=vmem, size = 0x2000, scoped, tag = 'output window, operand 0']
    %7 = vsyncpa [#allocation3], 0
    %s8 = scalar_lea.sflag [#allocation3], 1
    %9 = vsyncpa %s8, 0
    %10 = vsyncpa [#allocation6], 0
    %11 = vsyncpa [#allocation4], 0
    %s12 = scalar_lea.sflag [#allocation4], 1
    %13 = vsyncpa %s12, 0
    loop: start=0, step=1, limit=4
    $region2: #{tpu_custom_call.1} parent=1 // loop_pre_header
      _
    $region3: #{tpu_custom_call.1} parent=1 // loop_header
      %s15 = sphi 0, %s19
      %p16 = scmp.ge.s32.totalorder %s15, 4
      %s25 = sphi 0, %s27
      %s28 = sphi 0, %s25
      %s29 = sphi 0, %s28
      %s45 = sphi 0, %s29
      %s49 = sphi 0, %s49
      %s51 = sphi 0, %s49
      %s52 = sphi 0, %s51
      %s66 = sphi 0, %s52
      %s72 = sphi 0, %s74
      %s75 = sphi 0, %s72
      %s76 = sphi 0, %s75
      %s92 = sphi 0, %s76
    $region4: #{tpu_custom_call.1} parent=1 // loop_header_branch
      %18 = sbr.rel (%p16) target = $region8
    $region5: #{tpu_custom_call.1} parent=1 // loop_body
      %s20 = ssub.s32 %s15, 1
      %s21 = ssub.s32 %s15, 2
      %s22 = sadd.s32 %s15, 1
      %s23 = ssub.s32 %s15, %s22
      %p24 = scmp.eq.s32.totalorder %s23, 0
      %s26 = sadd.s32 %s25, 1
      %s27 = scalar_select %p24, %s25, %s26
      %p30 = pneg %p24
      %p31 = scmp.eq.s32.totalorder %s15, 1
      %p32 = por %p30, %p31
      %p33 = scmp.ne.s32.totalorder %s25, %s28
      %p34 = scmp.eq.s32.totalorder %s15, 0
      %p35 = por %p33, %p34
      %p36 = scmp.ne.s32.totalorder %s25, %s28
      %p37 = scmp.eq.s32.totalorder %s20, 1
      %p38 = por %p36, %p37
      %p39 = scmp.ne.s32.totalorder %s28, %s29
      %p40 = scmp.eq.s32.totalorder %s20, 0
      %p41 = por %p39, %p40
      %p42 = scmp.ne.s32.totalorder %s28, %s29
      %p43 = scmp.eq.s32.totalorder %s21, 1
      %p44 = por %p42, %p43
      %p46 = scmp.ne.s32.totalorder %s29, %s45
      %p47 = scmp.eq.s32.totalorder %s21, 0
      %p48 = por %p46, %p47
      %s50 = sadd.s32 %s49, 1
      %p53 = scmp.eq.s32.totalorder %s15, 1
      %p54 = scmp.ne.s32.totalorder %s49, %s51
      %p55 = scmp.eq.s32.totalorder %s15, 0
      %p56 = por %p54, %p55
      %p57 = scmp.ne.s32.totalorder %s49, %s51
      %p58 = scmp.eq.s32.totalorder %s20, 1
      %p59 = por %p57, %p58
      %p60 = scmp.ne.s32.totalorder %s51, %s52
      %p61 = scmp.eq.s32.totalorder %s20, 0
      %p62 = por %p60, %p61
      %p63 = scmp.ne.s32.totalorder %s51, %s52
      %p64 = scmp.eq.s32.totalorder %s21, 1
      %p65 = por %p63, %p64
      %p67 = scmp.ne.s32.totalorder %s52, %s66
      %p68 = scmp.eq.s32.totalorder %s21, 0
      %p69 = por %p67, %p68
      %s70 = ssub.s32 %s15, %s22
      %p71 = scmp.eq.s32.totalorder %s70, 0
      %s73 = sadd.s32 %s72, 1
      %s74 = scalar_select %p71, %s72, %s73
      %p77 = pneg %p71
      %p78 = scmp.eq.s32.totalorder %s15, 1
      %p79 = por %p77, %p78
      %p80 = scmp.ne.s32.totalorder %s72, %s75
      %p81 = scmp.eq.s32.totalorder %s15, 0
      %p82 = por %p80, %p81
      %p83 = scmp.ne.s32.totalorder %s72, %s75
      %p84 = scmp.eq.s32.totalorder %s20, 1
      %p85 = por %p83, %p84
      %p86 = scmp.ne.s32.totalorder %s75, %s76
      %p87 = scmp.eq.s32.totalorder %s20, 0
      %p88 = por %p86, %p87
      %p89 = scmp.ne.s32.totalorder %s75, %s76
      %p90 = scmp.eq.s32.totalorder %s21, 1
      %p91 = por %p89, %p90
      %p93 = scmp.ne.s32.totalorder %s76, %s92
      %p94 = scmp.eq.s32.totalorder %s21, 0
      %p95 = por %p93, %p94
      %p96 = scmp.le.s32.totalorder 1, %s15
      %p97 = scmp.lt.s32.totalorder %s15, 3
      %p98 = pnand %p96, %p97
      %p99 = pneg %p98
      // Predicated region
      $region9: #{tpu_custom_call.1} parent=5 // pred_check
        _
      $region10: #{tpu_custom_call.1} parent=5 // pred_check_branch
        %101 = sbr.rel (%p98) target = $region12
      $region11: #{tpu_custom_call.1} parent=5 // pred_region
        %s102 = ssub.s32 %s15, 1
        // Predicated region
        $region13: #{tpu_custom_call.1} parent=11 // pred_check
          %p103 = pneg %p62
        $region14: #{tpu_custom_call.1} parent=11 // pred_check_branch
          %105 = sbr.rel (%p103) target = $region16
        $region15: #{tpu_custom_call.1} parent=11 // pred_region
          %s107 = ssub.s32 64, 64
          %108 = vsyncadd [#allocation6], %s107
          %s110 = sshll.u32 [#allocation5], 4
          %s111 = int_to_ptr.vmem [resolvable:$true] %s110
          %113 = dma.hbm_to_vmem [thread:$0]  %s1, 64, %s111, [#allocation6]
        $region16: #{tpu_custom_call.1} parent=11 // pred_fallthru
          _
      $region12: #{tpu_custom_call.1} parent=5 // pred_fallthru
        _
      %p114 = scmp.lt.s32.totalorder %s15, 2
      // Predicated region
      $region17: #{tpu_custom_call.1} parent=5 // pred_check
        %p115 = pneg %p114
      $region18: #{tpu_custom_call.1} parent=5 // pred_check_branch
        %117 = sbr.rel (%p115) target = $region20
      $region19: #{tpu_custom_call.1} parent=5 // pred_region
        // Predicated region
        $region21: #{tpu_custom_call.1} parent=19 // pred_check
          %p118 = pneg %p35
        $region22: #{tpu_custom_call.1} parent=19 // pred_check_branch
          %120 = sbr.rel (%p118) target = $region24
        $region23: #{tpu_custom_call.1} parent=19 // pred_region
          %s121 = sand.u32 %s25, 1
          %s122 = scalar_lea.sflag [#allocation3], %s121
          %s123 = sand.u32 %s25, 1
          %s124 = smul.addr %s123, 8
          %s125 = scalar_lea.vmem [#allocation2], %s124
          %s127 = ssub.s32 128, 128
          %128 = vsyncadd %s122, %s127
          %s129 = smul.addr %s15, 2
          %s130 = smul.addr %s129, 64
          %s131 = scalar_lea.hbm %s0, %s130
          %s133 = sshll.u32 %s125, 4
          %s134 = int_to_ptr.vmem [resolvable:$true] %s133
          %136 = dma.hbm_to_vmem [thread:$0]  %s131, 128, %s134, %s122
        $region24: #{tpu_custom_call.1} parent=19 // pred_fallthru
          _
      $region20: #{tpu_custom_call.1} parent=5 // pred_fallthru
        _
      %p137 = scmp.le.s32.totalorder 1, %s15
      %p138 = scmp.lt.s32.totalorder %s15, 3
      %p139 = pnand %p137, %p138
      %p140 = pneg %p139
      // Predicated region
      $region25: #{tpu_custom_call.1} parent=5 // pred_check
        _
      $region26: #{tpu_custom_call.1} parent=5 // pred_check_branch
        %142 = sbr.rel (%p139) target = $region28
      $region27: #{tpu_custom_call.1} parent=5 // pred_region
        %s143 = ssub.s32 %s15, 1
        %s144 = sand.u32 %s28, 1
        %s145 = scalar_lea.sflag [#allocation3], %s144
        %s146 = sand.u32 %s28, 1
        %s147 = smul.addr %s146, 8
        %s148 = scalar_lea.vmem [#allocation2], %s147
        // Predicated region
        $region29: #{tpu_custom_call.1} parent=27 // pred_check
          %p149 = pneg %p41
        $region30: #{tpu_custom_call.1} parent=27 // pred_check_branch
          %151 = sbr.rel (%p149) target = $region32
        $region31: #{tpu_custom_call.1} parent=27 // pred_region
          %152 = dma.done %s145, 128
        $region32: #{tpu_custom_call.1} parent=27 // pred_fallthru
          _
        // Predicated region
        $region33: #{tpu_custom_call.1} parent=27 // pred_check
          %p153 = pneg %p62
        $region34: #{tpu_custom_call.1} parent=27 // pred_check_branch
          %155 = sbr.rel (%p153) target = $region36
        $region35: #{tpu_custom_call.1} parent=27 // pred_region
          %156 = dma.done [#allocation6], 64
        $region36: #{tpu_custom_call.1} parent=27 // pred_fallthru
          _
        %s157 = sand.u32 %s28, 1
        %s158 = scalar_lea.sflag [#allocation3], %s157
        %s159 = sand.u32 %s28, 1
        %s160 = smul.addr %s159, 8
        %s161 = scalar_lea.vmem [#allocation2], %s160
        %p162 = pneg %p41
        %p163 = pneg %p38
        %p164 = pneg %p62
        %p165 = pneg %p59
        %p166 = pneg %p88
        %p167 = pneg %p85
        %s168 = sand.u32 %s75, 1
        %s169 = scalar_lea.sflag [#allocation4], %s168
        %s170 = sand.u32 %s75, 1
        %s171 = smul.addr %s170, 8
        %s172 = scalar_lea.vmem [#allocation7], %s171
        %v173 = vld [vmem:[%s148] sm:$0xff]
        %v174 = vld [vmem:[#allocation5] sm:$0xf]
        %v176 = vcombine.high %v173, %v173
        %vm177 = vcmask 31744
        %v179 = vsel %vm177, %v174, 0
        %vm181 = vcmask 1043456
        %v182 = vsel %vm181, %v173, 0
        %v184 = vsel %vm181, %v176, 0
        %186 = vmatprep.subr.mxu0 %v184
        %187 = vmatpush1.msra.mxu0 %v182
        %188 = vmatprep.subr.mxu0 0.0
        %189 = vmatpush1.msra.mxu0 0.0
        %190 = vmatprep.subr.mxu0 0.0
        %191 = vmatpush1.msra.mxu0 0.0
        %192 = vmatprep.subr.mxu0 0.0
        %193 = vmatpush1.msra.mxu0 0.0
        %194 = vmatprep.subr.mxu0 0.0
        %195 = vmatpush1.msra.mxu0 0.0
        %196 = vmatprep.subr.mxu0 0.0
        %197 = vmatpush1.msra.mxu0 0.0
        %198 = vmatprep.subr.mxu0 0.0
        %199 = vmatpush1.msra.mxu0 0.0
        %200 = vmatprep.subr.mxu0 0.0
        %201 = vmatpush1.msra.mxu0 0.0
        %202 = vmatprep.subr.mxu0 0.0
        %203 = vmatpush1.msra.mxu0 0.0
        %204 = vmatprep.subr.mxu0 0.0
        %205 = vmatpush1.msra.mxu0 0.0
        %206 = vmatprep.subr.mxu0 0.0
        %207 = vmatpush1.msra.mxu0 0.0
        %208 = vmatprep.subr.mxu0 0.0
        %209 = vmatpush1.msra.mxu0 0.0
        %210 = vmatprep.subr.mxu0 0.0
        %211 = vmatpush1.msra.mxu0 0.0
        %212 = vmatprep.subr.mxu0 0.0
        %213 = vmatpush1.msra.mxu0 0.0
        %214 = vmatprep.subr.mxu0 0.0
        %215 = vmatpush1.msra.mxu0 0.0
        %216 = vmatprep.subr.mxu0 0.0
        %217 = vmatpush1.msra.mxu0 0.0
        %218 = vmatprep.subr.mxu0 0.0
        %219 = vmatpush1.msra.mxu0 0.0
        %220 = vmatprep.subr.mxu0 0.0
        %221 = vmatpush1.msra.mxu0 0.0
        %222 = vmatprep.subr.mxu0 0.0
        %223 = vmatpush1.msra.mxu0 0.0
        %224 = vmatprep.subr.mxu0 0.0
        %225 = vmatpush1.msra.mxu0 0.0
        %226 = vmatprep.subr.mxu0 0.0
        %227 = vmatpush1.msra.mxu0 0.0
        %228 = vmatprep.subr.mxu0 0.0
        %229 = vmatpush1.msra.mxu0 0.0
        %230 = vmatprep.subr.mxu0 0.0
        %231 = vmatpush1.msra.mxu0 0.0
        %232 = vmatprep.subr.mxu0 0.0
        %233 = vmatpush1.msra.mxu0 0.0
        %234 = vmatprep.subr.mxu0 0.0
        %235 = vmatpush1.msra.mxu0 0.0
        %236 = vmatprep.subr.mxu0 0.0
        %237 = vmatpush1.msra.mxu0 0.0
        %238 = vmatprep.subr.mxu0 0.0
        %239 = vmatpush1.msra.mxu0 0.0
        %240 = vmatprep.subr.mxu0 0.0
        %241 = vmatpush1.msra.mxu0 0.0
        %242 = vmatprep.subr.mxu0 0.0
        %243 = vmatpush1.msra.mxu0 0.0
        %244 = vmatprep.subr.mxu0 0.0
        %245 = vmatpush1.msra.mxu0 0.0
        %246 = vmatprep.subr.mxu0 0.0
        %247 = vmatpush1.msra.mxu0 0.0
        %248 = vmatprep.subr.mxu0 0.0
        %249 = vmatpush1.msra.mxu0 0.0
        %250 = vmatprep.mubr.f32.mxu0 0.0
        %251 = vmatmul.mubr.f32.gmra.mrb[0].mxu0 %v179
        %v252 = vpop.f32.mrb[0].mxu0
        %v253 = vadd.f32 0.0, %v252
        %v254 = vpop.f32.mrb[0].mxu0
        %v255 = vadd.f32 0.0, %v254
        %256 = vdwg.mxu0
        %v257 = vsel %vm181, %v253, 0.0
        %v258 = vsel %vm181, %v255, 0.0
        %v259 = vadd.f32 %v257, %v258
        %260 = vadd.xlane.f32.xlu0 %v259
        %v261 = vpop.xlane.xlu0 %260
        %v262 = vmul.f32 %v261, 0.00390625
        %v263 = vsub.f32 0.0, %v262
        %v264 = vmul.f32 %v263, 1.442695
        %v265 = vpow.pop %v264
        %v266 = vadd.f32 %v265, 1.0
        %v267 = vrcp.pop %v266
        %v268 = vmul.f32 1.0, %v267
        %v271 = vunpack.c.l.s4 839922192
        %v272 = vunpack.c.0.s8 %v271
        %v273 = vlaneseq
        %v274 = vshrl.u32 %v273, 7
        %v275 = vsub.s32 %v272, %v274
        %v276 = vrot.slane %v268, %v275
        %v278 = vmul.f32 %v173, %v276
        %279 = vst [vmem:[%s172] sm:$0xff] %v278
        %s280 = sand.u32 %s75, 1
        %s281 = scalar_lea.sflag [#allocation4], %s280
        %s282 = sand.u32 %s75, 1
        %s283 = smul.addr %s282, 8
        %s284 = scalar_lea.vmem [#allocation7], %s283
        // Predicated region
        $region37: #{tpu_custom_call.1} parent=27 // pred_check
          %p285 = pneg %p85
        $region38: #{tpu_custom_call.1} parent=27 // pred_check_branch
          %287 = sbr.rel (%p285) target = $region40
        $region39: #{tpu_custom_call.1} parent=27 // pred_region
          %s289 = ssub.s32 128, 128
          %290 = vsyncadd %s281, %s289
          %s291 = smul.addr %s20, 2
          %s292 = smul.addr %s291, 64
          %s293 = scalar_lea.hbm %s2, %s292
          %s295 = sshll.u32 %s284, 4
          %s296 = int_to_ptr.vmem [resolvable:$true] %s295
          %298 = dma.vmem_to_hbm [thread:$0]  %s296, 128, %s293, %s281
        $region40: #{tpu_custom_call.1} parent=27 // pred_fallthru
          _
      $region28: #{tpu_custom_call.1} parent=5 // pred_fallthru
        _
      %p299 = scmp.le.s32.totalorder 2, %s15
      // Predicated region
      $region41: #{tpu_custom_call.1} parent=5 // pred_check
        %p300 = pneg %p299
      $region42: #{tpu_custom_call.1} parent=5 // pred_check_branch
        %302 = sbr.rel (%p300) target = $region44
      $region43: #{tpu_custom_call.1} parent=5 // pred_region
        %s303 = ssub.s32 %s15, 2
        // Predicated region
        $region45: #{tpu_custom_call.1} parent=43 // pred_check
          %p304 = pneg %p91
        $region46: #{tpu_custom_call.1} parent=43 // pred_check_branch
          %306 = sbr.rel (%p304) target = $region48
        $region47: #{tpu_custom_call.1} parent=43 // pred_region
          %s307 = sand.u32 %s76, 1
          %s308 = scalar_lea.sflag [#allocation4], %s307
          %s309 = sand.u32 %s76, 1
          %s310 = smul.addr %s309, 8
          %s311 = scalar_lea.vmem [#allocation7], %s310
          %312 = dma.done %s308, 128
        $region48: #{tpu_custom_call.1} parent=43 // pred_fallthru
          _
      $region44: #{tpu_custom_call.1} parent=5 // pred_fallthru
        _
    $region6: #{tpu_custom_call.1} parent=1 // loop_footer
      %s19 = sadd.s32 1, %s15
    $region7: #{tpu_custom_call.1} parent=1 // loop_footer_branch
      %14 = sbr.rel target = $region3
    $region8: #{tpu_custom_call.1} parent=1 // loop_exit
      _
    %313 = vsyncpa [#allocation3], 1
    %s314 = scalar_lea.sflag [#allocation3], 1
    %315 = vsyncpa %s314, 1
    %316 = vsyncpa [#allocation6], 1
    %317 = vsyncpa [#allocation4], 1
    %s318 = scalar_lea.sflag [#allocation4], 1
    %319 = vsyncpa %s318, 1

</llo_original>
